<compile_context>
chip_gen: v6e
topology: v6e:2x2x1
jax: 0.10.0
libtpu: 0.0.40
codegen_flags: <defaults>
</compile_context>

<pallas_src>
import math

import jax
import jax.numpy as jnp
from jax.experimental import pallas as pl
from jax.experimental.pallas import tpu as pltpu


# ----------------------------------------------------------------------------
# GELU matching torch.nn.GELU() (erf formulation).  erf via Abramowitz &
# Stegun 7.1.26 — exp / mul / add / select only (guaranteed Mosaic lowerings),
# max abs error ~1.5e-7, well inside the 1e-4 test tolerance.
# ----------------------------------------------------------------------------
def _erf(x):
    a1, a2, a3, a4, a5 = (0.254829592, -0.284496736, 1.421413741,
                          -1.453152027, 1.061405429)
    p = 0.3275911
    sign = jnp.where(x < 0.0, -1.0, 1.0).astype(x.dtype)
    ax = jnp.abs(x)
    # Exact reciprocal; flip approx=True to push it onto the EUP if VALU ever
    # becomes the binding slot (tiny accuracy cost).
    t = pl.reciprocal(1.0 + p * ax, approx=False)
    poly = ((((a5 * t + a4) * t + a3) * t + a2) * t + a1) * t
    return sign * (1.0 - poly * jnp.exp(-ax * ax))


def _gelu_exact(x):
    return 0.5 * x * (1.0 + _erf(x * 0.7071067811865476))


# ----------------------------------------------------------------------------
# Fused MLP kernel.  grid = (M // tm,)   i: row tile (parallel).
#   x_ref  : (tm, C)      w1_ref : (C, H)   b1_ref : (1, H)   (weights resident)
#   w2_ref : (H, C)       b2_ref : (1, C)   o_ref  : (tm, C)
# ----------------------------------------------------------------------------
def _mlp_kernel(x_ref, w1_ref, b1_ref, w2_ref, b2_ref, o_ref):
    # c_fc:  (tm, C) @ (C, H) -> (tm, H), f32 MXU accumulation.
    h = jnp.dot(x_ref[...], w1_ref[...], preferred_element_type=jnp.float32)
    h = _gelu_exact(h + b1_ref[...].astype(jnp.float32))      # f32 elementwise
    # c_proj: (tm, H) @ (H, C) -> (tm, C); cast h to weight dtype for the MXU.
    out = jnp.dot(h.astype(w2_ref.dtype), w2_ref[...],
                  preferred_element_type=jnp.float32)
    o_ref[...] = (out + b2_ref[...].astype(jnp.float32)).astype(o_ref.dtype)
    # TODO(synk): training-mode dropout (p > 0) not implemented; p=0/eval is identity.


# ----------------------------------------------------------------------------
# Tiling helpers.
# ----------------------------------------------------------------------------
def _sublane_unit(dtype):
    # 8 for f32, 16 for bf16, 32 for int8/fp8 (sub-32-bit packs along sublanes).
    return max(8, 32 // jnp.dtype(dtype).itemsize)


def _pick_tile(dim, target, unit, mxu_align=256):
    """Largest divisor of `dim` that is a multiple of `unit` and <= target.
    Prefers MXU-aligned divisors; falls back to the full dim if none exist."""
    if dim <= max(target, unit):
        return dim                                  # full dim is always legal
    best = None
    best_aligned = None
    t = (max(target, unit) // unit) * unit
    while t >= unit:
        if dim % t == 0:
            if best is None:
                best = t
            if t % mxu_align == 0:
                best_aligned = t
                break
        t -= unit
    if best_aligned is not None and best is not None and best_aligned * 2 >= best:
        return best_aligned
    if best is not None:
        return best
    return dim


def _vmem_bytes(tm, C, H, in_dtype, out_dtype):
    isz = jnp.dtype(in_dtype).itemsize
    osz = jnp.dtype(out_dtype).itemsize
    weights = 2 * (2 * C * H) * isz        # W_fc + W_proj (conservative: 2 bufs)
    biases = 2 * (H + C) * isz
    x_io = 2 * tm * C * isz                # double-buffered x tile
    out_io = 2 * tm * C * osz              # double-buffered out tile
    hidden = tm * H * 4                    # f32 hidden activations
    return weights + biases + x_io + out_io + hidden


# ----------------------------------------------------------------------------
# Wrapper.
# ----------------------------------------------------------------------------
def mlp_forward(x, params, *, tm_target=512, compute_dtype=None):
    """x: (B, T, C) -> (B, T, C).  Fused c_fc -> GELU -> c_proj (dropout p=0).

    compute_dtype: optional (e.g. jnp.bfloat16) — casts activations/weights
    once outside the kernel; accumulation stays f32."""
    B, T, C = x.shape
    M = B * T
    H = params["w_fc"].shape[1]                     # 4 * C
    out_dtype = x.dtype

    x2d = x.reshape(M, C)
    w_fc, b_fc = params["w_fc"], params["b_fc"].reshape(1, H)
    w_proj, b_proj = params["w_proj"], params["b_proj"].reshape(1, C)
    if compute_dtype is not None:
        x2d = x2d.astype(compute_dtype)
        w_fc, b_fc = w_fc.astype(compute_dtype), b_fc.astype(compute_dtype)
        w_proj, b_proj = w_proj.astype(compute_dtype), b_proj.astype(compute_dtype)
    in_dtype = x2d.dtype

    unit = _sublane_unit(in_dtype)
    tm = _pick_tile(M, tm_target, unit)

    # Shrink the row tile until the resident-weights plan fits a v7x-safe
    # budget (~48 MiB, leaving headroom inside 64 MiB physical VMEM).
    vmem_budget = 48 * 1024 * 1024
    while _vmem_bytes(tm, C, H, in_dtype, out_dtype) > vmem_budget and tm > unit:
        new_tm = _pick_tile(M, max(unit, tm // 2), unit)
        if new_tm >= tm:
            break
        tm = new_tm
    # NOTE: if weights alone exceed the budget (very large C in f32), cast them
    # to bf16 (compute_dtype=jnp.bfloat16) or reintroduce hidden-axis streaming.

    # Keep >= 2 row tiles where possible so v7x's second TensorCore gets work.
    if M // tm == 1 and M >= 2 * unit:
        half = _pick_tile(M, M // 2, unit)
        if half < M:
            tm = half

    grid = (M // tm,)

    est_bytes = _vmem_bytes(tm, C, H, in_dtype, out_dtype)
    vmem_limit = int(min(56 * 1024 * 1024, max(16 * 1024 * 1024, est_bytes * 1.5)))

    isz = jnp.dtype(in_dtype).itemsize
    osz = jnp.dtype(out_dtype).itemsize
    cost = pl.CostEstimate(
        flops=4 * M * C * H,                       # two matmuls
        transcendentals=M * H,                     # one exp per hidden unit (erf)
        bytes_accessed=M * C * isz + 2 * C * H * isz + (H + C) * isz + M * C * osz,
    )

    out = pl.pallas_call(
        _mlp_kernel,
        out_shape=jax.ShapeDtypeStruct((M, C), out_dtype),
        grid_spec=pltpu.PrefetchScalarGridSpec(
            num_scalar_prefetch=0,
            grid=grid,
            in_specs=[
                pl.BlockSpec((tm, C), lambda i: (i, 0)),   # x rows (streamed)
                pl.BlockSpec((C, H), lambda i: (0, 0)),    # W_fc   (resident)
                pl.BlockSpec((1, H), lambda i: (0, 0)),    # b_fc   (resident)
                pl.BlockSpec((H, C), lambda i: (0, 0)),    # W_proj (resident)
                pl.BlockSpec((1, C), lambda i: (0, 0)),    # b_proj (resident)
            ],
            out_specs=pl.BlockSpec((tm, C), lambda i: (i, 0)),
        ),
        compiler_params=pltpu.CompilerParams(
            dimension_semantics=("parallel",),
            vmem_limit_bytes=vmem_limit),
        cost_estimate=cost,
    )(x2d, w_fc, b_fc, w_proj, b_proj)

    # dropout: p = 0 / eval mode -> identity.
    return out.reshape(B, T, C)


def init_params(key, n_embd):
    """Mimics nn.Linear default init (uniform +/- 1/sqrt(fan_in)).
    Weights stored transposed relative to PyTorch: shape (in, out)."""
    k1, k2, k3, k4 = jax.random.split(key, 4)
    hidden = 4 * n_embd
    b1 = 1.0 / math.sqrt(n_embd)
    b2 = 1.0 / math.sqrt(hidden)
    return {
        "w_fc": jax.random.uniform(k1, (n_embd, hidden), jnp.float32, -b1, b1),
        "b_fc": jax.random.uniform(k2, (hidden,), jnp.float32, -b1, b1),
        "w_proj": jax.random.uniform(k3, (hidden, n_embd), jnp.float32, -b2, b2),
        "b_proj": jax.random.uniform(k4, (n_embd,), jnp.float32, -b2, b2),
    }


if __name__ == "__main__":
    # small config: B=2, T=8, n_embd=64 (hidden = 256), dropout=0, bias=True
    B, T, C = 2, 8, 64

    key = jax.random.PRNGKey(0)
    kx, kp = jax.random.split(key)
    x = jax.random.normal(kx, (B, T, C), jnp.float32)
    params = init_params(kp, C)

    # small tm target so the test exercises the row grid: grid = (2,)
    y = mlp_forward(x, params, tm_target=8)
    y = jax.block_until_ready(y)

    # pure-JAX reference (exact-erf GELU; dropout p=0 -> identity)
    def ref(x, p):
        h = x.reshape(B * T, C) @ p["w_fc"] + p["b_fc"]
        h = jax.nn.gelu(h, approximate=False)
        o = h @ p["w_proj"] + p["b_proj"]
        return o.reshape(B, T, C)

    assert jnp.allclose(y, ref(x, params), atol=1e-4, rtol=1e-4)
    print("KERNEL_OK")
</pallas_src>

<mosaic_0001>
module attributes {stable_mosaic.version = 11 : i64} {
  func.func @_mlp_kernel(%arg0: i32, %arg1: memref<8x64xf32, #tpu.memory_space<vmem>>, %arg2: memref<64x256xf32, #tpu.memory_space<vmem>>, %arg3: memref<1x256xf32, #tpu.memory_space<vmem>>, %arg4: memref<256x64xf32, #tpu.memory_space<vmem>>, %arg5: memref<1x64xf32, #tpu.memory_space<vmem>>, %arg6: memref<8x64xf32, #tpu.memory_space<vmem>>) attributes {dimension_semantics = [#tpu.dimension_semantics<parallel>], iteration_bounds = array<i64: 2>, scalar_prefetch = 0 : i64, scratch_operands = 0 : i64, tpu.core_type = #tpu.core_type<tc>, window_params = [{transform_indices = @transform_0, window_bounds = array<i64: 8, 64>}, {pipeline_mode = #tpu.pipeline_mode<synchronous>, transform_indices = @transform_1, window_bounds = array<i64: 64, 256>}, {pipeline_mode = #tpu.pipeline_mode<synchronous>, transform_indices = @transform_2, window_bounds = array<i64: 1, 256>}, {pipeline_mode = #tpu.pipeline_mode<synchronous>, transform_indices = @transform_3, window_bounds = array<i64: 256, 64>}, {pipeline_mode = #tpu.pipeline_mode<synchronous>, transform_indices = @transform_4, window_bounds = array<i64: 1, 64>}, {transform_indices = @transform_5, window_bounds = array<i64: 8, 64>}]} {
    %c0 = arith.constant 0 : index
    %c0_0 = arith.constant 0 : index
    %0 = vector.load %arg1[%c0, %c0_0] : memref<8x64xf32, #tpu.memory_space<vmem>>, vector<8x64xf32>
    %c0_1 = arith.constant 0 : index
    %c0_2 = arith.constant 0 : index
    %1 = vector.load %arg2[%c0_1, %c0_2] : memref<64x256xf32, #tpu.memory_space<vmem>>, vector<64x256xf32>
    %cst = arith.constant dense<0.000000e+00> : vector<8x256xf32>
    %2 = tpu.matmul %0, %1, %cst {dimension_numbers = #tpu.dot_dimension_numbers<[1], [0], [0], [1], [0, 0, 1, 1], [], []>} : vector<8x64xf32>, vector<64x256xf32>, vector<8x256xf32> -> vector<8x256xf32>
    %c0_3 = arith.constant 0 : index
    %c0_4 = arith.constant 0 : index
    %3 = vector.load %arg3[%c0_3, %c0_4] : memref<1x256xf32, #tpu.memory_space<vmem>>, vector<1x256xf32>
    %4 = vector.broadcast %3 : vector<1x256xf32> to vector<8x256xf32>
    %5 = arith.addf %2, %4 : vector<8x256xf32>
    %cst_5 = arith.constant 5.000000e-01 : f32
    %6 = vector.broadcast %cst_5 : f32 to vector<8x256xf32>
    %7 = arith.mulf %6, %5 : vector<8x256xf32>
    %cst_6 = arith.constant 0.707106769 : f32
    %8 = vector.broadcast %cst_6 : f32 to vector<8x256xf32>
    %9 = arith.mulf %5, %8 : vector<8x256xf32>
    %cst_7 = arith.constant 0.000000e+00 : f32
    %10 = vector.broadcast %cst_7 : f32 to vector<8x256xf32>
    %11 = arith.cmpf olt, %9, %10 : vector<8x256xf32>
    %cst_8 = arith.constant -1.000000e+00 : f32
    %cst_9 = arith.constant 1.000000e+00 : f32
    %12 = vector.broadcast %cst_8 : f32 to vector<8x256xf32>
    %13 = vector.broadcast %cst_9 : f32 to vector<8x256xf32>
    %14 = arith.select %11, %12, %13 : vector<8x256xi1>, vector<8x256xf32>
    %15 = math.absf %9 : vector<8x256xf32>
    %cst_10 = arith.constant 0.327591091 : f32
    %16 = vector.broadcast %cst_10 : f32 to vector<8x256xf32>
    %17 = arith.mulf %16, %15 : vector<8x256xf32>
    %cst_11 = arith.constant 1.000000e+00 : f32
    %18 = vector.broadcast %cst_11 : f32 to vector<8x256xf32>
    %19 = arith.addf %18, %17 : vector<8x256xf32>
    %20 = tpu.reciprocal %19 : vector<8x256xf32> -> vector<8x256xf32>
    %cst_12 = arith.constant 1.06140542 : f32
    %21 = vector.broadcast %cst_12 : f32 to vector<8x256xf32>
    %22 = arith.mulf %21, %20 : vector<8x256xf32>
    %cst_13 = arith.constant -1.45315206 : f32
    %23 = vector.broadcast %cst_13 : f32 to vector<8x256xf32>
    %24 = arith.addf %22, %23 : vector<8x256xf32>
    %25 = arith.mulf %24, %20 : vector<8x256xf32>
    %cst_14 = arith.constant 1.42141378 : f32
    %26 = vector.broadcast %cst_14 : f32 to vector<8x256xf32>
    %27 = arith.addf %25, %26 : vector<8x256xf32>
    %28 = arith.mulf %27, %20 : vector<8x256xf32>
    %cst_15 = arith.constant -0.284496725 : f32
    %29 = vector.broadcast %cst_15 : f32 to vector<8x256xf32>
    %30 = arith.addf %28, %29 : vector<8x256xf32>
    %31 = arith.mulf %30, %20 : vector<8x256xf32>
    %cst_16 = arith.constant 0.254829586 : f32
    %32 = vector.broadcast %cst_16 : f32 to vector<8x256xf32>
    %33 = arith.addf %31, %32 : vector<8x256xf32>
    %34 = arith.mulf %33, %20 : vector<8x256xf32>
    %cst_17 = arith.constant 0.000000e+00 : f32
    %35 = vector.broadcast %cst_17 : f32 to vector<8x256xf32>
    %36 = arith.subf %35, %15 : vector<8x256xf32>
    %37 = arith.mulf %36, %15 : vector<8x256xf32>
    %38 = math.exp %37 : vector<8x256xf32>
    %39 = arith.mulf %34, %38 : vector<8x256xf32>
    %cst_18 = arith.constant 1.000000e+00 : f32
    %40 = vector.broadcast %cst_18 : f32 to vector<8x256xf32>
    %41 = arith.subf %40, %39 : vector<8x256xf32>
    %42 = arith.mulf %14, %41 : vector<8x256xf32>
    %cst_19 = arith.constant 1.000000e+00 : f32
    %43 = vector.broadcast %cst_19 : f32 to vector<8x256xf32>
    %44 = arith.addf %43, %42 : vector<8x256xf32>
    %45 = arith.mulf %7, %44 : vector<8x256xf32>
    %c0_20 = arith.constant 0 : index
    %c0_21 = arith.constant 0 : index
    %46 = vector.load %arg4[%c0_20, %c0_21] : memref<256x64xf32, #tpu.memory_space<vmem>>, vector<256x64xf32>
    %cst_22 = arith.constant dense<0.000000e+00> : vector<8x64xf32>
    %47 = tpu.matmul %45, %46, %cst_22 {dimension_numbers = #tpu.dot_dimension_numbers<[1], [0], [0], [1], [0, 0, 1, 1], [], []>} : vector<8x256xf32>, vector<256x64xf32>, vector<8x64xf32> -> vector<8x64xf32>
    %c0_23 = arith.constant 0 : index
    %c0_24 = arith.constant 0 : index
    %48 = vector.load %arg5[%c0_23, %c0_24] : memref<1x64xf32, #tpu.memory_space<vmem>>, vector<1x64xf32>
    %49 = vector.broadcast %48 : vector<1x64xf32> to vector<8x64xf32>
    %50 = arith.addf %47, %49 : vector<8x64xf32>
    %c0_25 = arith.constant 0 : index
    %c0_26 = arith.constant 0 : index
    %51 = vector.load %arg6[%c0_25, %c0_26] : memref<8x64xf32, #tpu.memory_space<vmem>>, vector<8x64xf32>
    tpu.vector_store %arg6[%c0_25, %c0_26], %50 {strides = array<i32>} : memref<8x64xf32, #tpu.memory_space<vmem>>, vector<8x64xf32>,
    return
  }
  func.func @transform_0(%arg0: i32) -> (i32, i32) {
    %c0_i32 = arith.constant 0 : i32
    %c0_i32_0 = arith.constant 0 : i32
    return %arg0, %c0_i32 : i32, i32
  }
  func.func @transform_1(%arg0: i32) -> (i32, i32) {
    %c0_i32 = arith.constant 0 : i32
    %c0_i32_0 = arith.constant 0 : i32
    %c0_i32_1 = arith.constant 0 : i32
    return %c0_i32, %c0_i32_0 : i32, i32
  }
  func.func @transform_2(%arg0: i32) -> (i32, i32) {
    %c0_i32 = arith.constant 0 : i32
    %c0_i32_0 = arith.constant 0 : i32
    %c0_i32_1 = arith.constant 0 : i32
    return %c0_i32, %c0_i32_0 : i32, i32
  }
  func.func @transform_3(%arg0: i32) -> (i32, i32) {
    %c0_i32 = arith.constant 0 : i32
    %c0_i32_0 = arith.constant 0 : i32
    %c0_i32_1 = arith.constant 0 : i32
    return %c0_i32, %c0_i32_0 : i32, i32
  }
  func.func @transform_4(%arg0: i32) -> (i32, i32) {
    %c0_i32 = arith.constant 0 : i32
    %c0_i32_0 = arith.constant 0 : i32
    %c0_i32_1 = arith.constant 0 : i32
    return %c0_i32, %c0_i32_0 : i32, i32
  }
  func.func @transform_5(%arg0: i32) -> (i32, i32) {
    %c0_i32 = arith.constant 0 : i32
    %c0_i32_0 = arith.constant 0 : i32
    return %arg0, %c0_i32 : i32, i32
  }
}

</mosaic_0001>

<llo_original>
// kernel: tpu_custom_call.1
$region0: #{tpu_custom_call.1}
  #allocation0 [shape = 'u32[]', space=smem, size = 0x4, offset = 0x4, fixed_abs, tag = 'smem constant byte address 0x4 - core index']
  #allocation1 [shape = 'u32[144,128]{1,0:T(1,128)}', space=vmem, size = 0x12000, scoped, tag = 'internal scratch']
  %s0 = inlined_call_operand.vmem [shape: f32[16,64], index: 0, kind: input, shape index: {}]
  %s1 = inlined_call_operand.vmem [shape: f32[64,256], index: 1, kind: input, shape index: {}]
  %s2 = inlined_call_operand.vmem [shape: f32[1,256], index: 2, kind: input, shape index: {}]
  %s3 = inlined_call_operand.vmem [shape: f32[256,64], index: 3, kind: input, shape index: {}]
  %s4 = inlined_call_operand.vmem [shape: f32[1,64], index: 4, kind: input, shape index: {}]
  %s5 = inlined_call_operand.hbm [shape: f32[16,64], index: 5, kind: output, shape index: {}]
  %s6 = sld [smem:[#allocation0]]
  $region53: #{tpu_custom_call.1} parent=0
    _
  %s8 = ssub.s32 1, %s6
  %s9 = scalar_select 0, %s8, %s6
  $region1: #{tpu_custom_call.1} parent=0
    #allocation2 [shape = 'u8[8192]{0}', space=vmem, size = 0x2000, scoped, tag = 'output window, operand 0']
    #allocation3 [shape = 's32[2]{0}', space=sflag, size = 0x8, scoped, tag = 'scoped memory for tpu_custom_call.1']
    %10 = vsyncpa [#allocation3], 0
    %s11 = scalar_lea.sflag [#allocation3], 1
    %12 = vsyncpa %s11, 0
    loop: start=0, step=1, limit=4
    $region2: #{tpu_custom_call.1} parent=1 // loop_pre_header
      _
    $region3: #{tpu_custom_call.1} parent=1 // loop_header
      %s14 = sphi 0, %s18
      %p15 = scmp.ge.s32.totalorder %s14, 4
      %s24 = sphi 0, %s26
      %s27 = sphi 0, %s24
      %s28 = sphi 0, %s27
      %s44 = sphi 0, %s28
      %s48 = sphi 0, %s48
      %s50 = sphi 0, %s48
      %s51 = sphi 0, %s50
      %s65 = sphi 0, %s51
      %s69 = sphi 0, %s69
      %s71 = sphi 0, %s69
      %s72 = sphi 0, %s71
      %s86 = sphi 0, %s72
      %s90 = sphi 0, %s90
      %s92 = sphi 0, %s90
      %s93 = sphi 0, %s92
      %s107 = sphi 0, %s93
      %s111 = sphi 0, %s111
      %s113 = sphi 0, %s111
      %s114 = sphi 0, %s113
      %s128 = sphi 0, %s114
      %s134 = sphi 0, %s136
      %s137 = sphi 0, %s134
      %s138 = sphi 0, %s137
      %s154 = sphi 0, %s138
    $region4: #{tpu_custom_call.1} parent=1 // loop_header_branch
      %17 = sbr.rel (%p15) target = $region8
    $region5: #{tpu_custom_call.1} parent=1 // loop_body
      %s19 = ssub.s32 %s14, 1
      %s20 = ssub.s32 %s14, 2
      %s21 = sadd.s32 %s14, 1
      %s22 = ssub.s32 %s14, %s21
      %p23 = scmp.eq.s32.totalorder %s22, 0
      %s25 = sadd.s32 %s24, 1
      %s26 = scalar_select %p23, %s24, %s25
      %p29 = pneg %p23
      %p30 = scmp.eq.s32.totalorder %s14, 1
      %p31 = por %p29, %p30
      %p32 = scmp.ne.s32.totalorder %s24, %s27
      %p33 = scmp.eq.s32.totalorder %s14, 0
      %p34 = por %p32, %p33
      %p35 = scmp.ne.s32.totalorder %s24, %s27
      %p36 = scmp.eq.s32.totalorder %s19, 1
      %p37 = por %p35, %p36
      %p38 = scmp.ne.s32.totalorder %s27, %s28
      %p39 = scmp.eq.s32.totalorder %s19, 0
      %p40 = por %p38, %p39
      %p41 = scmp.ne.s32.totalorder %s27, %s28
      %p42 = scmp.eq.s32.totalorder %s20, 1
      %p43 = por %p41, %p42
      %p45 = scmp.ne.s32.totalorder %s28, %s44
      %p46 = scmp.eq.s32.totalorder %s20, 0
      %p47 = por %p45, %p46
      %s49 = sadd.s32 %s48, 1
      %p52 = scmp.eq.s32.totalorder %s14, 1
      %p53 = scmp.ne.s32.totalorder %s48, %s50
      %p54 = scmp.eq.s32.totalorder %s14, 0
      %p55 = por %p53, %p54
      %p56 = scmp.ne.s32.totalorder %s48, %s50
      %p57 = scmp.eq.s32.totalorder %s19, 1
      %p58 = por %p56, %p57
      %p59 = scmp.ne.s32.totalorder %s50, %s51
      %p60 = scmp.eq.s32.totalorder %s19, 0
      %p61 = por %p59, %p60
      %p62 = scmp.ne.s32.totalorder %s50, %s51
      %p63 = scmp.eq.s32.totalorder %s20, 1
      %p64 = por %p62, %p63
      %p66 = scmp.ne.s32.totalorder %s51, %s65
      %p67 = scmp.eq.s32.totalorder %s20, 0
      %p68 = por %p66, %p67
      %s70 = sadd.s32 %s69, 1
      %p73 = scmp.eq.s32.totalorder %s14, 1
      %p74 = scmp.ne.s32.totalorder %s69, %s71
      %p75 = scmp.eq.s32.totalorder %s14, 0
      %p76 = por %p74, %p75
      %p77 = scmp.ne.s32.totalorder %s69, %s71
      %p78 = scmp.eq.s32.totalorder %s19, 1
      %p79 = por %p77, %p78
      %p80 = scmp.ne.s32.totalorder %s71, %s72
      %p81 = scmp.eq.s32.totalorder %s19, 0
      %p82 = por %p80, %p81
      %p83 = scmp.ne.s32.totalorder %s71, %s72
      %p84 = scmp.eq.s32.totalorder %s20, 1
      %p85 = por %p83, %p84
      %p87 = scmp.ne.s32.totalorder %s72, %s86
      %p88 = scmp.eq.s32.totalorder %s20, 0
      %p89 = por %p87, %p88
      %s91 = sadd.s32 %s90, 1
      %p94 = scmp.eq.s32.totalorder %s14, 1
      %p95 = scmp.ne.s32.totalorder %s90, %s92
      %p96 = scmp.eq.s32.totalorder %s14, 0
      %p97 = por %p95, %p96
      %p98 = scmp.ne.s32.totalorder %s90, %s92
      %p99 = scmp.eq.s32.totalorder %s19, 1
      %p100 = por %p98, %p99
      %p101 = scmp.ne.s32.totalorder %s92, %s93
      %p102 = scmp.eq.s32.totalorder %s19, 0
      %p103 = por %p101, %p102
      %p104 = scmp.ne.s32.totalorder %s92, %s93
      %p105 = scmp.eq.s32.totalorder %s20, 1
      %p106 = por %p104, %p105
      %p108 = scmp.ne.s32.totalorder %s93, %s107
      %p109 = scmp.eq.s32.totalorder %s20, 0
      %p110 = por %p108, %p109
      %s112 = sadd.s32 %s111, 1
      %p115 = scmp.eq.s32.totalorder %s14, 1
      %p116 = scmp.ne.s32.totalorder %s111, %s113
      %p117 = scmp.eq.s32.totalorder %s14, 0
      %p118 = por %p116, %p117
      %p119 = scmp.ne.s32.totalorder %s111, %s113
      %p120 = scmp.eq.s32.totalorder %s19, 1
      %p121 = por %p119, %p120
      %p122 = scmp.ne.s32.totalorder %s113, %s114
      %p123 = scmp.eq.s32.totalorder %s19, 0
      %p124 = por %p122, %p123
      %p125 = scmp.ne.s32.totalorder %s113, %s114
      %p126 = scmp.eq.s32.totalorder %s20, 1
      %p127 = por %p125, %p126
      %p129 = scmp.ne.s32.totalorder %s114, %s128
      %p130 = scmp.eq.s32.totalorder %s20, 0
      %p131 = por %p129, %p130
      %s132 = ssub.s32 %s14, %s21
      %p133 = scmp.eq.s32.totalorder %s132, 0
      %s135 = sadd.s32 %s134, 1
      %s136 = scalar_select %p133, %s134, %s135
      %p139 = pneg %p133
      %p140 = scmp.eq.s32.totalorder %s14, 1
      %p141 = por %p139, %p140
      %p142 = scmp.ne.s32.totalorder %s134, %s137
      %p143 = scmp.eq.s32.totalorder %s14, 0
      %p144 = por %p142, %p143
      %p145 = scmp.ne.s32.totalorder %s134, %s137
      %p146 = scmp.eq.s32.totalorder %s19, 1
      %p147 = por %p145, %p146
      %p148 = scmp.ne.s32.totalorder %s137, %s138
      %p149 = scmp.eq.s32.totalorder %s19, 0
      %p150 = por %p148, %p149
      %p151 = scmp.ne.s32.totalorder %s137, %s138
      %p152 = scmp.eq.s32.totalorder %s20, 1
      %p153 = por %p151, %p152
      %p155 = scmp.ne.s32.totalorder %s138, %s154
      %p156 = scmp.eq.s32.totalorder %s20, 0
      %p157 = por %p155, %p156
      %p158 = scmp.le.s32.totalorder 1, %s14
      %p159 = scmp.lt.s32.totalorder %s14, 3
      %p160 = pnand %p158, %p159
      %p161 = pneg %p160
      // Predicated region
      $region9: #{tpu_custom_call.1} parent=5 // pred_check
        _
      $region10: #{tpu_custom_call.1} parent=5 // pred_check_branch
        %163 = sbr.rel (%p160) target = $region12
      $region11: #{tpu_custom_call.1} parent=5 // pred_region
        %s164 = ssub.s32 %s14, 1
        // Predicated region
        $region13: #{tpu_custom_call.1} parent=11 // pred_check
          %p165 = pneg %p61
        $region14: #{tpu_custom_call.1} parent=11 // pred_check_branch
          %167 = sbr.rel (%p165) target = $region16
        $region15: #{tpu_custom_call.1} parent=11 // pred_region
          _
        $region16: #{tpu_custom_call.1} parent=11 // pred_fallthru
          _
        // Predicated region
        $region17: #{tpu_custom_call.1} parent=11 // pred_check
          %p168 = pneg %p82
        $region18: #{tpu_custom_call.1} parent=11 // pred_check_branch
          %170 = sbr.rel (%p168) target = $region20
        $region19: #{tpu_custom_call.1} parent=11 // pred_region
          _
        $region20: #{tpu_custom_call.1} parent=11 // pred_fallthru
          _
        // Predicated region
        $region21: #{tpu_custom_call.1} parent=11 // pred_check
          %p171 = pneg %p103
        $region22: #{tpu_custom_call.1} parent=11 // pred_check_branch
          %173 = sbr.rel (%p171) target = $region24
        $region23: #{tpu_custom_call.1} parent=11 // pred_region
          _
        $region24: #{tpu_custom_call.1} parent=11 // pred_fallthru
          _
        // Predicated region
        $region25: #{tpu_custom_call.1} parent=11 // pred_check
          %p174 = pneg %p124
        $region26: #{tpu_custom_call.1} parent=11 // pred_check_branch
          %176 = sbr.rel (%p174) target = $region28
        $region27: #{tpu_custom_call.1} parent=11 // pred_region
          _
        $region28: #{tpu_custom_call.1} parent=11 // pred_fallthru
          _
      $region12: #{tpu_custom_call.1} parent=5 // pred_fallthru
        _
      %p177 = scmp.lt.s32.totalorder %s14, 2
      // Predicated region
      $region29: #{tpu_custom_call.1} parent=5 // pred_check
        %p178 = pneg %p177
      $region30: #{tpu_custom_call.1} parent=5 // pred_check_branch
        %180 = sbr.rel (%p178) target = $region32
      $region31: #{tpu_custom_call.1} parent=5 // pred_region
        // Predicated region
        $region33: #{tpu_custom_call.1} parent=31 // pred_check
          %p181 = pneg %p34
        $region34: #{tpu_custom_call.1} parent=31 // pred_check_branch
          %183 = sbr.rel (%p181) target = $region36
        $region35: #{tpu_custom_call.1} parent=31 // pred_region
          %p184 = scmp.lt.s32.totalorder %s14, 1
          %s185 = scalar_select %p184, %s14, 1
          %s186 = smul.addr %s185, 8
          %s187 = scalar_lea.vmem %s0, %s186
        $region36: #{tpu_custom_call.1} parent=31 // pred_fallthru
          _
      $region32: #{tpu_custom_call.1} parent=5 // pred_fallthru
        _
      %p188 = scmp.le.s32.totalorder 1, %s14
      %p189 = scmp.lt.s32.totalorder %s14, 3
      %p190 = pnand %p188, %p189
      %p191 = pneg %p190
      // Predicated region
      $region37: #{tpu_custom_call.1} parent=5 // pred_check
        _
      $region38: #{tpu_custom_call.1} parent=5 // pred_check_branch
        %193 = sbr.rel (%p190) target = $region40
      $region39: #{tpu_custom_call.1} parent=5 // pred_region
        %s194 = ssub.s32 %s14, 1
        %p195 = scmp.lt.s32.totalorder %s19, 1
        %s196 = scalar_select %p195, %s19, 1
        %s197 = smul.addr %s196, 8
        %s198 = scalar_lea.vmem %s0, %s197
        %p199 = pneg %p40
        %p200 = pneg %p37
        %p201 = pneg %p61
        %p202 = pneg %p58
        %p203 = pneg %p82
        %p204 = pneg %p79
        %p205 = pneg %p103
        %p206 = pneg %p100
        %p207 = pneg %p124
        %p208 = pneg %p121
        %p209 = pneg %p150
        %p210 = pneg %p147
        %s211 = sand.u32 %s137, 1
        %s212 = scalar_lea.sflag [#allocation3], %s211
        %s213 = sand.u32 %s137, 1
        %s214 = smul.addr %s213, 8
        %s215 = scalar_lea.vmem [#allocation2], %s214
        %p216 = scmp.lt.s32.totalorder %s19, 1
        %s217 = scalar_select %p216, %s19, 1
        %s218 = smul.addr %s217, 8
        %s219 = scalar_lea.vmem %s0, %s218
        %v220 = vld [vmem:[%s219] sm:$0xff]
        %v221 = vld [vmem:[%s1] sm:$0xff]
        %v222 = vld [vmem:[%s1 + $0x8] sm:$0xff]
        %v223 = vld [vmem:[%s1 + $0x10] sm:$0xff]
        %v224 = vld [vmem:[%s1 + $0x18] sm:$0xff]
        %v225 = vld [vmem:[%s1 + $0x20] sm:$0xff]
        %v226 = vld [vmem:[%s1 + $0x28] sm:$0xff]
        %v227 = vld [vmem:[%s1 + $0x30] sm:$0xff]
        %v228 = vld [vmem:[%s1 + $0x38] sm:$0xff]
        %v229 = vld [vmem:[%s1 + $0x40] sm:$0xff]
        %v230 = vld [vmem:[%s1 + $0x48] sm:$0xff]
        %v231 = vld [vmem:[%s1 + $0x50] sm:$0xff]
        %v232 = vld [vmem:[%s1 + $0x58] sm:$0xff]
        %v233 = vld [vmem:[%s1 + $0x60] sm:$0xff]
        %v234 = vld [vmem:[%s1 + $0x68] sm:$0xff]
        %v235 = vld [vmem:[%s1 + $0x70] sm:$0xff]
        %v236 = vld [vmem:[%s1 + $0x78] sm:$0xff]
        %v237 = vld [vmem:[%s2] sm:$0x3]
        %v239 = vlaneseq
        %v240 = vshrl.u32 %v239, 7
        %v241 = vsub.s32 0, %v240
        %v242 = vrot.slane %v237, %v241
        %v243 = vlaneseq
        %v244 = vshrl.u32 %v243, 7
        %v245 = vsub.s32 1, %v244
        %v246 = vrot.slane %v237, %v245
        %vm249 = vcmask 523264
        %v251 = vsel %vm249, %v220, 0
        %253 = vmatprep.subr.mxu0 0.0
        %254 = vmatpush1.msra.mxu0 0.0
        %255 = vmatprep.subr.mxu0 0.0
        %256 = vmatpush1.msra.mxu0 0.0
        %257 = vmatprep.subr.mxu0 0.0
        %258 = vmatpush1.msra.mxu0 0.0
        %259 = vmatprep.subr.mxu0 0.0
        %260 = vmatpush1.msra.mxu0 0.0
        %261 = vmatprep.subr.mxu0 0.0
        %262 = vmatpush1.msra.mxu0 0.0
        %263 = vmatprep.subr.mxu0 0.0
        %264 = vmatpush1.msra.mxu0 0.0
        %265 = vmatprep.subr.mxu0 0.0
        %266 = vmatpush1.msra.mxu0 0.0
        %267 = vmatprep.subr.mxu0 0.0
        %268 = vmatpush1.msra.mxu0 0.0
        %269 = vmatprep.subr.mxu0 %v236
        %270 = vmatpush1.msra.mxu0 %v235
        %271 = vmatprep.subr.mxu0 %v234
        %272 = vmatpush1.msra.mxu0 %v233
        %273 = vmatprep.subr.mxu0 %v232
        %274 = vmatpush1.msra.mxu0 %v231
        %275 = vmatprep.subr.mxu0 %v230
        %276 = vmatpush1.msra.mxu0 %v229
        %277 = vmatprep.subr.mxu0 %v228
        %278 = vmatpush1.msra.mxu0 %v227
        %279 = vmatprep.subr.mxu0 %v226
        %280 = vmatpush1.msra.mxu0 %v225
        %281 = vmatprep.subr.mxu0 %v224
        %282 = vmatpush1.msra.mxu0 %v223
        %283 = vmatprep.subr.mxu0 %v222
        %284 = vmatpush1.msra.mxu0 %v221
        %285 = vmatprep.subr.mxu0 0.0
        %286 = vmatpush2.msra.mxu0 0.0
        %287 = vmatprep.subr.mxu0 0.0
        %288 = vmatpush2.msra.mxu0 0.0
        %289 = vmatprep.subr.mxu0 0.0
        %290 = vmatpush2.msra.mxu0 0.0
        %291 = vmatprep.subr.mxu0 0.0
        %292 = vmatpush2.msra.mxu0 0.0
        %293 = vmatprep.subr.mxu0 0.0
        %294 = vmatpush2.msra.mxu0 0.0
        %295 = vmatprep.subr.mxu0 0.0
        %296 = vmatpush2.msra.mxu0 0.0
        %297 = vmatprep.subr.mxu0 0.0
        %298 = vmatpush2.msra.mxu0 0.0
        %299 = vmatprep.subr.mxu0 0.0
        %300 = vmatpush2.msra.mxu0 0.0
        %301 = vmatprep.subr.mxu0 0.0
        %302 = vmatpush2.msra.mxu0 0.0
        %303 = vmatprep.subr.mxu0 0.0
        %304 = vmatpush2.msra.mxu0 0.0
        %305 = vmatprep.subr.mxu0 0.0
        %306 = vmatpush2.msra.mxu0 0.0
        %307 = vmatprep.subr.mxu0 0.0
        %308 = vmatpush2.msra.mxu0 0.0
        %309 = vmatprep.subr.mxu0 0.0
        %310 = vmatpush2.msra.mxu0 0.0
        %311 = vmatprep.subr.mxu0 0.0
        %312 = vmatpush2.msra.mxu0 0.0
        %313 = vmatprep.subr.mxu0 0.0
        %314 = vmatpush2.msra.mxu0 0.0
        %315 = vmatprep.subr.mxu0 0.0
        %316 = vmatpush2.msra.mxu0 0.0
        %317 = vmatprep.mubr.f32.mxu0 0.0
        %318 = vmatmul.mubr.f32.gmra.mxu0 %v251
        %v319 = vpop.f32.mrf.mxu0
        %v320 = vadd.f32 %v242, %v319
        %v321 = vpop.f32.mrf.mxu0
        %v322 = vadd.f32 %v246, %v321
        %323 = vdwg.mxu0
        %v324 = vmul.f32 %v320, 0.5
        %v325 = vmul.f32 %v322, 0.5
        %v326 = vmul.f32 %v320, 0.70710677
        %v327 = vmul.f32 %v322, 0.70710677
        %vm328 = vcmp.lt.f32.partialorder %v326, 0.0
        %vm329 = vcmp.lt.f32.partialorder %v327, 0.0
        %v330 = vsel %vm328, -1.0, 1.0
        %v331 = vsel %vm329, -1.0, 1.0
        %v332 = vand.u32 2147483647, %v326
        %v333 = vand.u32 2147483647, %v327
        %v334 = vmul.f32 %v332, 0.3275911
        %v335 = vmul.f32 %v333, 0.3275911
        %v336 = vadd.f32 %v334, 1.0
        %v337 = vadd.f32 %v335, 1.0
        %v338 = vrcp.pop %v336
        %v339 = vrcp.pop %v337
        %v340 = vmul.f32 %v338, 1.0614054
        %v341 = vmul.f32 %v339, 1.0614054
        %v342 = vadd.f32 %v340, -1.4531521
        %v343 = vadd.f32 %v341, -1.4531521
        %v344 = vmul.f32 %v342, %v338
        %v345 = vmul.f32 %v343, %v339
        %v346 = vadd.f32 %v344, 1.4214138
        %v347 = vadd.f32 %v345, 1.4214138
        %v348 = vmul.f32 %v346, %v338
        %v349 = vmul.f32 %v347, %v339
        %v350 = vadd.f32 %v348, -0.28449672
        %v351 = vadd.f32 %v349, -0.28449672
        %v352 = vmul.f32 %v350, %v338
        %v353 = vmul.f32 %v351, %v339
        %v354 = vadd.f32 %v352, 0.2548296
        %v355 = vadd.f32 %v353, 0.2548296
        %v356 = vmul.f32 %v354, %v338
        %v357 = vmul.f32 %v355, %v339
        %v358 = vsub.f32 0.0, %v332
        %v359 = vsub.f32 0.0, %v333
        %v360 = vmul.f32 %v358, %v332
        %v361 = vmul.f32 %v359, %v333
        %v362 = vmul.f32 %v360, 1.442695
        %v363 = vpow.pop %v362
        %v364 = vmul.f32 %v361, 1.442695
        %v365 = vpow.pop %v364
        %v366 = vmul.f32 %v356, %v363
        %v367 = vmul.f32 %v357, %v365
        %v368 = vsub.f32 1.0, %v366
        %v369 = vsub.f32 1.0, %v367
        %v370 = vmul.f32 %v330, %v368
        %v371 = vmul.f32 %v331, %v369
        %v372 = vadd.f32 %v370, 1.0
        %v373 = vadd.f32 %v371, 1.0
        %v374 = vmul.f32 %v324, %v372
        %v375 = vmul.f32 %v325, %v373
        %v376 = vld [vmem:[%s3] sm:$0xff]
        %v377 = vld [vmem:[%s3 + $0x8] sm:$0xff]
        %v378 = vld [vmem:[%s3 + $0x10] sm:$0xff]
        %v379 = vld [vmem:[%s3 + $0x18] sm:$0xff]
        %v380 = vld [vmem:[%s3 + $0x20] sm:$0xff]
        %v381 = vld [vmem:[%s3 + $0x28] sm:$0xff]
        %v382 = vld [vmem:[%s3 + $0x30] sm:$0xff]
        %v383 = vld [vmem:[%s3 + $0x38] sm:$0xff]
        %v384 = vld [vmem:[%s3 + $0x40] sm:$0xff]
        %v385 = vld [vmem:[%s3 + $0x48] sm:$0xff]
        %v386 = vld [vmem:[%s3 + $0x50] sm:$0xff]
        %v387 = vld [vmem:[%s3 + $0x58] sm:$0xff]
        %v388 = vld [vmem:[%s3 + $0x60] sm:$0xff]
        %v389 = vld [vmem:[%s3 + $0x68] sm:$0xff]
        %v390 = vld [vmem:[%s3 + $0x70] sm:$0xff]
        %v391 = vld [vmem:[%s3 + $0x78] sm:$0xff]
        %v392 = vld [vmem:[%s3 + $0x80] sm:$0xff]
        %v393 = vld [vmem:[%s3 + $0x88] sm:$0xff]
        %v394 = vld [vmem:[%s3 + $0x90] sm:$0xff]
        %v395 = vld [vmem:[%s3 + $0x98] sm:$0xff]
        %v396 = vld [vmem:[%s3 + $0xa0] sm:$0xff]
        %v397 = vld [vmem:[%s3 + $0xa8] sm:$0xff]
        %v398 = vld [vmem:[%s3 + $0xb0] sm:$0xff]
        %v399 = vld [vmem:[%s3 + $0xb8] sm:$0xff]
        %v400 = vld [vmem:[%s3 + $0xc0] sm:$0xff]
        %v401 = vld [vmem:[%s3 + $0xc8] sm:$0xff]
        %v402 = vld [vmem:[%s3 + $0xd0] sm:$0xff]
        %v403 = vld [vmem:[%s3 + $0xd8] sm:$0xff]
        %v404 = vld [vmem:[%s3 + $0xe0] sm:$0xff]
        %v405 = vld [vmem:[%s3 + $0xe8] sm:$0xff]
        %v406 = vld [vmem:[%s3 + $0xf0] sm:$0xff]
        %v407 = vld [vmem:[%s3 + $0xf8] sm:$0xff]
        %v408 = vld [vmem:[%s4] sm:$0x1]
        %v410 = vlaneseq
        %v411 = vshrl.u32 %v410, 7
        %v412 = vsub.s32 0, %v411
        %v413 = vrot.slane %v408, %v412
        %415 = vmatprep.subr.mxu0 0.0
        %416 = vmatpush1.msra.mxu0 %v391
        %417 = vmatprep.subr.mxu0 0.0
        %418 = vmatpush1.msra.mxu0 %v390
        %419 = vmatprep.subr.mxu0 0.0
        %420 = vmatpush1.msra.mxu0 %v389
        %421 = vmatprep.subr.mxu0 0.0
        %422 = vmatpush1.msra.mxu0 %v388
        %423 = vmatprep.subr.mxu0 0.0
        %424 = vmatpush1.msra.mxu0 %v387
        %425 = vmatprep.subr.mxu0 0.0
        %426 = vmatpush1.msra.mxu0 %v386
        %427 = vmatprep.subr.mxu0 0.0
        %428 = vmatpush1.msra.mxu0 %v385
        %429 = vmatprep.subr.mxu0 0.0
        %430 = vmatpush1.msra.mxu0 %v384
        %431 = vmatprep.subr.mxu0 0.0
        %432 = vmatpush1.msra.mxu0 %v383
        %433 = vmatprep.subr.mxu0 0.0
        %434 = vmatpush1.msra.mxu0 %v382
        %435 = vmatprep.subr.mxu0 0.0
        %436 = vmatpush1.msra.mxu0 %v381
        %437 = vmatprep.subr.mxu0 0.0
        %438 = vmatpush1.msra.mxu0 %v380
        %439 = vmatprep.subr.mxu0 0.0
        %440 = vmatpush1.msra.mxu0 %v379
        %441 = vmatprep.subr.mxu0 0.0
        %442 = vmatpush1.msra.mxu0 %v378
        %443 = vmatprep.subr.mxu0 0.0
        %444 = vmatpush1.msra.mxu0 %v377
        %445 = vmatprep.subr.mxu0 0.0
        %446 = vmatpush1.msra.mxu0 %v376
        %447 = vmatprep.subr.mxu0 0.0
        %448 = vmatpush2.msra.mxu0 %v407
        %449 = vmatprep.subr.mxu0 0.0
        %450 = vmatpush2.msra.mxu0 %v406
        %451 = vmatprep.subr.mxu0 0.0
        %452 = vmatpush2.msra.mxu0 %v405
        %453 = vmatprep.subr.mxu0 0.0
        %454 = vmatpush2.msra.mxu0 %v404
        %455 = vmatprep.subr.mxu0 0.0
        %456 = vmatpush2.msra.mxu0 %v403
        %457 = vmatprep.subr.mxu0 0.0
        %458 = vmatpush2.msra.mxu0 %v402
        %459 = vmatprep.subr.mxu0 0.0
        %460 = vmatpush2.msra.mxu0 %v401
        %461 = vmatprep.subr.mxu0 0.0
        %462 = vmatpush2.msra.mxu0 %v400
        %463 = vmatprep.subr.mxu0 0.0
        %464 = vmatpush2.msra.mxu0 %v399
        %465 = vmatprep.subr.mxu0 0.0
        %466 = vmatpush2.msra.mxu0 %v398
        %467 = vmatprep.subr.mxu0 0.0
        %468 = vmatpush2.msra.mxu0 %v397
        %469 = vmatprep.subr.mxu0 0.0
        %470 = vmatpush2.msra.mxu0 %v396
        %471 = vmatprep.subr.mxu0 0.0
        %472 = vmatpush2.msra.mxu0 %v395
        %473 = vmatprep.subr.mxu0 0.0
        %474 = vmatpush2.msra.mxu0 %v394
        %475 = vmatprep.subr.mxu0 0.0
        %476 = vmatpush2.msra.mxu0 %v393
        %477 = vmatprep.subr.mxu0 0.0
        %478 = vmatpush2.msra.mxu0 %v392
        %479 = vmatprep.mubr.f32.mxu0 %v375
        %480 = vmatmul.mubr.f32.gmra.mxu0 %v374
        %v481 = vpop.f32.mrf.mxu0
        %v482 = vadd.f32 %v413, %v481
        %v483 = vpop.f32.mrf.mxu0
        %484 = vdwg.mxu0
        %485 = vst.msk [vmem:[%s215] sm:$0xff] %vm249, %v482
        %s486 = sand.u32 %s137, 1
        %s487 = scalar_lea.sflag [#allocation3], %s486
        %s488 = sand.u32 %s137, 1
        %s489 = smul.addr %s488, 8
        %s490 = scalar_lea.vmem [#allocation2], %s489
        // Predicated region
        $region41: #{tpu_custom_call.1} parent=39 // pred_check
          %p491 = pneg %p147
        $region42: #{tpu_custom_call.1} parent=39 // pred_check_branch
          %493 = sbr.rel (%p491) target = $region44
        $region43: #{tpu_custom_call.1} parent=39 // pred_region
          %s495 = ssub.s32 128, 128
          %496 = vsyncadd %s487, %s495
          %s497 = smul.addr %s19, 128
          %s498 = scalar_lea.hbm %s5, %s497
          %s500 = sshll.u32 %s490, 4
          %s501 = int_to_ptr.vmem [resolvable:$true] %s500
          %503 = dma.vmem_to_hbm [thread:$0]  %s501, 128, %s498, %s487
        $region44: #{tpu_custom_call.1} parent=39 // pred_fallthru
          _
      $region40: #{tpu_custom_call.1} parent=5 // pred_fallthru
        _
      %p504 = scmp.le.s32.totalorder 2, %s14
      // Predicated region
      $region45: #{tpu_custom_call.1} parent=5 // pred_check
        %p505 = pneg %p504
      $region46: #{tpu_custom_call.1} parent=5 // pred_check_branch
        %507 = sbr.rel (%p505) target = $region48
      $region47: #{tpu_custom_call.1} parent=5 // pred_region
        %s508 = ssub.s32 %s14, 2
        // Predicated region
        $region49: #{tpu_custom_call.1} parent=47 // pred_check
          %p509 = pneg %p153
        $region50: #{tpu_custom_call.1} parent=47 // pred_check_branch
          %511 = sbr.rel (%p509) target = $region52
        $region51: #{tpu_custom_call.1} parent=47 // pred_region
          %s512 = sand.u32 %s138, 1
          %s513 = scalar_lea.sflag [#allocation3], %s512
          %s514 = sand.u32 %s138, 1
          %s515 = smul.addr %s514, 8
          %s516 = scalar_lea.vmem [#allocation2], %s515
          %517 = dma.done %s513, 128
        $region52: #{tpu_custom_call.1} parent=47 // pred_fallthru
          _
      $region48: #{tpu_custom_call.1} parent=5 // pred_fallthru
        _
    $region6: #{tpu_custom_call.1} parent=1 // loop_footer
      %s18 = sadd.s32 1, %s14
    $region7: #{tpu_custom_call.1} parent=1 // loop_footer_branch
      %13 = sbr.rel target = $region3
    $region8: #{tpu_custom_call.1} parent=1 // loop_exit
      _
    %518 = vsyncpa [#allocation3], 1
    %s519 = scalar_lea.sflag [#allocation3], 1
    %520 = vsyncpa %s519, 1

</llo_original>
